<compile_context>
chip_gen: v7x
topology: tpu7x:2x2x1
jax: 0.10.0
libtpu: 0.0.40
codegen_flags: <defaults>
</compile_context>

<pallas_src>
import jax
import jax.numpy as jnp
from jax.experimental import pallas as pl
from jax.experimental.pallas import tpu as pltpu


def fused_linear_cat_kernel(x_ref, w_ref, o_ref):
    # (1, 33) @ (33, 128) -> (1, 128), f32 accumulate on the MXU.
    # Result lanes are already [y0 | y1 | y1 | y0]; bias is row 32 of w_ref.
    o_ref[...] = jnp.dot(
        x_ref[...], w_ref[...], preferred_element_type=jnp.float32
    ).astype(o_ref.dtype)


def build_fused_weight(w_t, b):
    """Build the (33, 128) block weight once (model constant, not in hot path).

    w_t: (16, 32) = torch weight transposed; b: (1, 32) bias.
    """
    z = jnp.zeros_like(w_t)
    top = jnp.concatenate([w_t, z, z, w_t], axis=-1)       # (16, 128)
    bot = jnp.concatenate([z, w_t, w_t, z], axis=-1)       # (16, 128)
    bias_row = jnp.concatenate([b, b, b, b], axis=-1)      # (1, 128)
    return jnp.concatenate([top, bot, bias_row], axis=0)   # (33, 128)


def model_forward(x, w_big):
    # x: (2, 16), w_big: (33, 128)  ->  (128,)
    # Flatten x to a single lane-dense row and append the constant-1 bias lane.
    x_flat = jnp.concatenate(
        [x.reshape(1, 32), jnp.ones((1, 1), dtype=x.dtype)], axis=-1
    )  # (1, 33)

    flops = 2 * 1 * 33 * 128
    bytes_accessed = 4 * (x_flat.size + w_big.size + 128)

    out = pl.pallas_call(
        fused_linear_cat_kernel,
        out_shape=jax.ShapeDtypeStruct((1, 128), jnp.float32),
        in_specs=[
            pl.BlockSpec((1, 33), lambda: (0, 0)),
            pl.BlockSpec((33, 128), lambda: (0, 0)),
        ],
        out_specs=pl.BlockSpec((1, 128), lambda: (0, 0)),
        compiler_params=pltpu.CompilerParams(vmem_limit_bytes=1 << 20),
        cost_estimate=pl.CostEstimate(
            flops=flops, transcendentals=0, bytes_accessed=bytes_accessed
        ),
    )(x_flat, w_big)
    # Glue: drop the leading singleton dim to match the torch 1-D output.
    return out.reshape(-1)


def reference_forward(x, w_t, b):
    y = x @ w_t + b  # (2, 32)
    y0, y1 = y[0], y[1]
    x12 = jnp.concatenate([y0, y1], axis=-1)
    x21 = jnp.concatenate([y1, y0], axis=-1)
    return jnp.concatenate([x12, x21], axis=0)


if __name__ == "__main__":
    key = jax.random.PRNGKey(0)
    k_x, k_w, k_b = jax.random.split(key, 3)

    in_features, out_features = 16, 32
    bound = 1.0 / jnp.sqrt(in_features)

    x = jax.random.normal(k_x, (2, in_features), dtype=jnp.float32)
    # Deterministic "Linear" params (uniform, like torch's default init).
    w = jax.random.uniform(k_w, (out_features, in_features),
                           minval=-bound, maxval=bound, dtype=jnp.float32)
    b = jax.random.uniform(k_b, (1, out_features),
                           minval=-bound, maxval=bound, dtype=jnp.float32)

    w_t = w.T                          # (16, 32)
    w_big = build_fused_weight(w_t, b)  # (33, 128), built once

    out = model_forward(x, w_big)
    jax.block_until_ready(out)

    ref = reference_forward(x, w_t, b)
    assert out.shape == (128,), out.shape
    assert jnp.allclose(out, ref, atol=1e-5, rtol=1e-5)

    print("KERNEL_OK")
</pallas_src>

<mosaic_0001>
module attributes {stable_mosaic.version = 11 : i64} {
  func.func @fused_linear_cat_kernel(%arg0: memref<1x33xf32, #tpu.memory_space<vmem>>, %arg1: memref<33x128xf32, #tpu.memory_space<vmem>>, %arg2: memref<1x128xf32, #tpu.memory_space<vmem>>) attributes {dimension_semantics = [], scalar_prefetch = 0 : i64, scratch_operands = 0 : i64, tpu.core_type = #tpu.core_type<tc>} {
    %c0 = arith.constant 0 : index
    %c0_0 = arith.constant 0 : index
    %0 = vector.load %arg0[%c0, %c0_0] : memref<1x33xf32, #tpu.memory_space<vmem>>, vector<1x33xf32>
    %c0_1 = arith.constant 0 : index
    %c0_2 = arith.constant 0 : index
    %1 = vector.load %arg1[%c0_1, %c0_2] : memref<33x128xf32, #tpu.memory_space<vmem>>, vector<33x128xf32>
    %cst = arith.constant dense<0.000000e+00> : vector<1x128xf32>
    %2 = tpu.matmul %0, %1, %cst {dimension_numbers = #tpu.dot_dimension_numbers<[1], [0], [0], [1], [0, 0, 1, 1], [], []>} : vector<1x33xf32>, vector<33x128xf32>, vector<1x128xf32> -> vector<1x128xf32>
    %c0_3 = arith.constant 0 : index
    %c0_4 = arith.constant 0 : index
    %3 = vector.load %arg2[%c0_3, %c0_4] : memref<1x128xf32, #tpu.memory_space<vmem>>, vector<1x128xf32>
    tpu.vector_store %arg2[%c0_3, %c0_4], %2 {strides = array<i32>} : memref<1x128xf32, #tpu.memory_space<vmem>>, vector<1x128xf32>,
    return
  }
}

</mosaic_0001>

<llo_original>
// kernel: tpu_custom_call.1
$region0: #{tpu_custom_call.1}
  #allocation0 [shape = 'u32[]', space=smem, size = 0x4, offset = 0x4, fixed_abs, tag = 'smem constant byte address 0x4 - core index']
  #allocation1 [shape = 'u32[144,128]{1,0:T(1,128)}', space=vmem, size = 0x12000, scoped, tag = 'internal scratch']
  %s0 = inlined_call_operand.hbm [shape: f32[1,33], index: 0, kind: input, shape index: {}]
  %s1 = inlined_call_operand.hbm [shape: f32[33,128], index: 1, kind: input, shape index: {}]
  %s2 = inlined_call_operand.hbm [shape: f32[1,128], index: 2, kind: output, shape index: {}]
  %s3 = sld [smem:[#allocation0]]
  $region26: #{tpu_custom_call.1} parent=0
    _
  %s5 = ssub.s32 1, %s3
  %s6 = scalar_select 0, %s5, %s3
  $region1: #{tpu_custom_call.1} parent=0
    #allocation2 [shape = 'u8[512]{0}', space=vmem, size = 0x400, scoped, tag = 'input window, operand 0, single buffered']
    #allocation3 [shape = 's32[1]{0}', space=sflag, size = 0x4, scoped, tag = 'scoped memory for tpu_custom_call.1']
    #allocation4 [shape = 's32[1]{0}', space=sflag, size = 0x4, scoped, tag = 'scoped memory for tpu_custom_call.1']
    #allocation5 [shape = 'u8[20480]{0}', space=vmem, size = 0x5000, scoped, tag = 'input window, operand 1, single buffered']
    #allocation6 [shape = 's32[1]{0}', space=sflag, size = 0x4, scoped, tag = 'scoped memory for tpu_custom_call.1']
    #allocation7 [shape = 'u8[512]{0}', space=vmem, size = 0x400, scoped, tag = 'output window, operand 0, single buffered']
    %7 = vsyncpa [#allocation3], 0
    %8 = vsyncpa [#allocation6], 0
    %9 = vsyncpa [#allocation4], 0
    // Predicated region
    $region2: #{tpu_custom_call.1} parent=1 // pred_check
      _
    $region3: #{tpu_custom_call.1} parent=1 // pred_check_branch
      %11 = sbr.rel (0) target = $region5
    $region4: #{tpu_custom_call.1} parent=1 // pred_region
      %s13 = ssub.s32 16, 16
      %14 = vsyncadd [#allocation3], %s13
      %s16 = sshll.u32 [#allocation2], 4
      %s17 = int_to_ptr.vmem [resolvable:$true] %s16
      %19 = dma.hbm_to_vmem [thread:$0]  %s0, 16, %s17, [#allocation3]
    $region5: #{tpu_custom_call.1} parent=1 // pred_fallthru
      _
    // Predicated region
    $region6: #{tpu_custom_call.1} parent=1 // pred_check
      _
    $region7: #{tpu_custom_call.1} parent=1 // pred_check_branch
      %21 = sbr.rel (0) target = $region9
    $region8: #{tpu_custom_call.1} parent=1 // pred_region
      %s23 = ssub.s32 640, 640
      %24 = vsyncadd [#allocation6], %s23
      %s25 = sshll.u32 [#allocation5], 4
      %s26 = int_to_ptr.vmem [resolvable:$true] %s25
      %31 = dma.hbm_to_vmem [thread:$0]  %s1, 640, %s26, [#allocation6], 128, 128, 8
    $region9: #{tpu_custom_call.1} parent=1 // pred_fallthru
      _
    // Predicated region
    $region10: #{tpu_custom_call.1} parent=1 // pred_check
      _
    $region11: #{tpu_custom_call.1} parent=1 // pred_check_branch
      %33 = sbr.rel (0) target = $region13
    $region12: #{tpu_custom_call.1} parent=1 // pred_region
      %34 = dma.done [#allocation3], 16
    $region13: #{tpu_custom_call.1} parent=1 // pred_fallthru
      _
    // Predicated region
    $region14: #{tpu_custom_call.1} parent=1 // pred_check
      _
    $region15: #{tpu_custom_call.1} parent=1 // pred_check_branch
      %36 = sbr.rel (0) target = $region17
    $region16: #{tpu_custom_call.1} parent=1 // pred_region
      %37 = dma.done [#allocation6], 640
    $region17: #{tpu_custom_call.1} parent=1 // pred_fallthru
      _
    %v38 = vld [vmem:[#allocation2] sm:$0x1]
    %v39 = vld [vmem:[#allocation5] sm:$0xff]
    %v40 = vld [vmem:[#allocation5 + $0x8] sm:$0xff]
    %v41 = vld [vmem:[#allocation5 + $0x10] sm:$0xff]
    %v42 = vld [vmem:[#allocation5 + $0x18] sm:$0xff]
    %v43 = vld [vmem:[#allocation5 + $0x20] sm:$0x1]
    %vm44 = vcmask 269312
    %v46 = vsel %vm44, %v38, 0
    %vm48 = vcmask 1040384
    %v50 = vsel %vm48, %v43, 0
    %52 = vmatprep.subr.mxu0 0.0
    %53 = vmatpush1.msra.mxu0 %v39
    %54 = vmatprep.subr.mxu0 0.0
    %55 = vmatpush1.msra.mxu0 %v40
    %56 = vmatprep.subr.mxu0 0.0
    %57 = vmatpush1.msra.mxu0 %v41
    %58 = vmatprep.subr.mxu0 0.0
    %59 = vmatpush1.msra.mxu0 %v42
    %60 = vmatprep.subr.mxu0 0.0
    %61 = vmatpush1.msra.mxu0 %v50
    %62 = vmatprep.subr.mxu0 0.0
    %63 = vmatpush1.msra.mxu0 0.0
    %64 = vmatprep.subr.mxu0 0.0
    %65 = vmatpush1.msra.mxu0 0.0
    %66 = vmatprep.subr.mxu0 0.0
    %67 = vmatpush1.msra.mxu0 0.0
    %68 = vmatprep.subr.mxu0 0.0
    %69 = vmatpush1.msra.mxu0 0.0
    %70 = vmatprep.subr.mxu0 0.0
    %71 = vmatpush1.msra.mxu0 0.0
    %72 = vmatprep.subr.mxu0 0.0
    %73 = vmatpush1.msra.mxu0 0.0
    %74 = vmatprep.subr.mxu0 0.0
    %75 = vmatpush1.msra.mxu0 0.0
    %76 = vmatprep.subr.mxu0 0.0
    %77 = vmatpush1.msra.mxu0 0.0
    %78 = vmatprep.subr.mxu0 0.0
    %79 = vmatpush1.msra.mxu0 0.0
    %80 = vmatprep.subr.mxu0 0.0
    %81 = vmatpush1.msra.mxu0 0.0
    %82 = vmatprep.subr.mxu0 0.0
    %83 = vmatpush1.msra.mxu0 0.0
    %84 = vmatprep.subr.mxu0 0.0
    %85 = vmatpush1.msra.mxu0 0.0
    %86 = vmatprep.subr.mxu0 0.0
    %87 = vmatpush1.msra.mxu0 0.0
    %88 = vmatprep.subr.mxu0 0.0
    %89 = vmatpush1.msra.mxu0 0.0
    %90 = vmatprep.subr.mxu0 0.0
    %91 = vmatpush1.msra.mxu0 0.0
    %92 = vmatprep.subr.mxu0 0.0
    %93 = vmatpush1.msra.mxu0 0.0
    %94 = vmatprep.subr.mxu0 0.0
    %95 = vmatpush1.msra.mxu0 0.0
    %96 = vmatprep.subr.mxu0 0.0
    %97 = vmatpush1.msra.mxu0 0.0
    %98 = vmatprep.subr.mxu0 0.0
    %99 = vmatpush1.msra.mxu0 0.0
    %100 = vmatprep.subr.mxu0 0.0
    %101 = vmatpush1.msra.mxu0 0.0
    %102 = vmatprep.subr.mxu0 0.0
    %103 = vmatpush1.msra.mxu0 0.0
    %104 = vmatprep.subr.mxu0 0.0
    %105 = vmatpush1.msra.mxu0 0.0
    %106 = vmatprep.subr.mxu0 0.0
    %107 = vmatpush1.msra.mxu0 0.0
    %108 = vmatprep.subr.mxu0 0.0
    %109 = vmatpush1.msra.mxu0 0.0
    %110 = vmatprep.subr.mxu0 0.0
    %111 = vmatpush1.msra.mxu0 0.0
    %112 = vmatprep.subr.mxu0 0.0
    %113 = vmatpush1.msra.mxu0 0.0
    %114 = vmatprep.subr.mxu0 0.0
    %115 = vmatpush1.msra.mxu0 0.0
    %116 = vmatprep.mubr.f32.mxu0 0.0
    %117 = vmatmul.mubr.f32.gmra.mrb[0].mxu0 %v46
    %v118 = vpop.f32.mrb[0].mxu0
    %v119 = vadd.f32 0.0, %v118
    %v120 = vpop.f32.mrb[0].mxu0
    %121 = vdwg.mxu0
    %122 = vst [vmem:[#allocation7] sm:$0x1] %v119
    // Predicated region
    $region18: #{tpu_custom_call.1} parent=1 // pred_check
      _
    $region19: #{tpu_custom_call.1} parent=1 // pred_check_branch
      %124 = sbr.rel (0) target = $region21
    $region20: #{tpu_custom_call.1} parent=1 // pred_region
      %s126 = ssub.s32 16, 16
      %127 = vsyncadd [#allocation4], %s126
      %s129 = sshll.u32 [#allocation7], 4
      %s130 = int_to_ptr.vmem [resolvable:$true] %s129
      %132 = dma.vmem_to_hbm [thread:$0]  %s130, 16, %s2, [#allocation4]
    $region21: #{tpu_custom_call.1} parent=1 // pred_fallthru
      _
    // Predicated region
    $region22: #{tpu_custom_call.1} parent=1 // pred_check
      _
    $region23: #{tpu_custom_call.1} parent=1 // pred_check_branch
      %134 = sbr.rel (0) target = $region25
    $region24: #{tpu_custom_call.1} parent=1 // pred_region
      %135 = dma.done [#allocation4], 16
    $region25: #{tpu_custom_call.1} parent=1 // pred_fallthru
      _
    %136 = vsyncpa [#allocation3], 1
    %137 = vsyncpa [#allocation6], 1
    %138 = vsyncpa [#allocation4], 1

</llo_original>
